<compile_context>
chip_gen: v5e
topology: v5e:2x2
jax: 0.10.0
libtpu: 0.0.40
codegen_flags: <defaults>
</compile_context>

<pallas_src>
import jax
import jax.numpy as jnp
from jax.experimental import pallas as pl
from jax.experimental.pallas import tpu as pltpu


def _round_up(x, m):
    return ((x + m - 1) // m) * m


def _choose_tiles(n):
    """Return (n_pad, tm, tk) obeying the (8, 128) BlockSpec rules.

    Small graphs: one full block (block dims equal the padded array dims).
    Large graphs: tm=256 row tile, tk=512 reduction tile (A tile = 512 KiB f32,
    1 MiB double-buffered -> safely inside the 32 MiB scoped VMEM on v7x).
    """
    if n <= 512:
        n_pad = _round_up(n, 8)
        return n_pad, n_pad, n_pad
    tm, tk = 256, 512
    n_pad = _round_up(n, 512)  # lcm(tm, tk)
    return n_pad, tm, tk


def gcn_kernel(a_ref, x_ref, deg_ref, w_ref, b_ref, o_ref, acc_ref):
    # a_ref:   (tm, tk)  dense adjacency tile, a[dst, src] = edge multiplicity
    # x_ref:   (tk, Fin) node-feature tile
    # deg_ref: (tm, 1)   clamped destination in-degree for these rows
    # w_ref:   (Fin, Fout_pad) linear weight (transposed vs. torch layout, padded)
    # b_ref:   (1, Fout_pad)   linear bias (padded)
    # o_ref:   (tm, Fout_pad)  output tile
    # acc_ref: (tm, Fin) f32 scratch accumulator for sum-aggregation
    k = pl.program_id(1)

    @pl.when(k == 0)
    def _():
        acc_ref[...] = jnp.zeros_like(acc_ref)

    # sum aggregation partial: acc[d, f] += sum_{s in this k-tile} A[d, s] * x[s, f]
    acc_ref[...] += jnp.dot(a_ref[...], x_ref[...],
                            preferred_element_type=jnp.float32)

    @pl.when(k == pl.num_programs(1) - 1)
    def _():
        # mean aggregation (degree precomputed & clamped in the glue)
        mean = acc_ref[...] / deg_ref[...]
        # update: relu(linear(mean))
        h = jnp.dot(mean, w_ref[...], preferred_element_type=jnp.float32) + b_ref[...]
        o_ref[...] = jnp.maximum(h, 0.0).astype(o_ref.dtype)


def gcn_conv_layer(x, edge_index, weight, bias):
    """x: (N, Fin) f32, edge_index: (2, E) i32, weight: (Fout, Fin), bias: (Fout,)."""
    n, fin = x.shape
    fout = weight.shape[0]
    fout_p = _round_up(fout, 128)

    n_pad, tm, tk = _choose_tiles(n)

    # --- glue (O(E) / O(N^2) densification, stays in XLA) ---
    # destination in-degree, zero degrees clamped to 1, padded rows get deg 1
    deg = jnp.zeros((n,), jnp.float32).at[edge_index[0]].add(1.0)
    deg = jnp.where(deg == 0.0, 1.0, deg)
    deg = jnp.pad(deg, (0, n_pad - n), constant_values=1.0).reshape(n_pad, 1)

    # dense adjacency (handles duplicate edges exactly like scatter_add_)
    adj = jnp.zeros((n_pad, n_pad), jnp.float32).at[edge_index[0], edge_index[1]].add(1.0)

    x_p = jnp.pad(x.astype(jnp.float32), ((0, n_pad - n), (0, 0)))
    w_t = jnp.pad(weight.T.astype(jnp.float32), ((0, 0), (0, fout_p - fout)))
    b2 = jnp.pad(bias.astype(jnp.float32), (0, fout_p - fout)).reshape(1, fout_p)

    grid = (n_pad // tm, n_pad // tk)

    out = pl.pallas_call(
        gcn_kernel,
        out_shape=jax.ShapeDtypeStruct((n_pad, fout_p), jnp.float32),
        grid_spec=pltpu.PrefetchScalarGridSpec(
            num_scalar_prefetch=0,
            grid=grid,
            in_specs=[
                pl.BlockSpec((tm, tk), lambda i, k: (i, k)),      # A tile
                pl.BlockSpec((tk, fin), lambda i, k: (k, 0)),     # X tile
                pl.BlockSpec((tm, 1), lambda i, k: (i, 0)),       # deg rows
                pl.BlockSpec((fin, fout_p), lambda i, k: (0, 0)),  # W
                pl.BlockSpec((1, fout_p), lambda i, k: (0, 0)),    # bias
            ],
            out_specs=pl.BlockSpec((tm, fout_p), lambda i, k: (i, 0)),
            scratch_shapes=[pltpu.VMEM((tm, fin), jnp.float32)],
        ),
        compiler_params=pltpu.CompilerParams(
            dimension_semantics=("parallel", "arbitrary"),
            vmem_limit_bytes=64 * 1024 * 1024,
        ),
    )(adj, x_p, deg, w_t, b2)

    return out[:n, :fout]


def reference(x, edge_index, weight, bias):
    n = x.shape[0]
    adj = jnp.zeros((n, n), jnp.float32).at[edge_index[0], edge_index[1]].add(1.0)
    agg = adj @ x
    deg = jnp.sum(adj, axis=-1, keepdims=True)
    deg = jnp.where(deg == 0.0, 1.0, deg)
    mean = agg / deg
    return jnp.maximum(mean @ weight.T + bias[None, :], 0.0)


if __name__ == "__main__":
    key = jax.random.PRNGKey(0)
    k_x, k_e, k_w, k_b = jax.random.split(key, 4)

    num_nodes = 16
    in_features = 8
    out_features = 32
    num_edges = 48

    x = jax.random.normal(k_x, (num_nodes, in_features), dtype=jnp.float32)
    edge_index = jax.random.randint(k_e, (2, num_edges), 0, num_nodes, dtype=jnp.int32)

    # Deterministic nn.Linear-shaped params: weight (out, in), bias (out,)
    bound = 1.0 / (in_features ** 0.5)
    weight = jax.random.uniform(k_w, (out_features, in_features),
                                minval=-bound, maxval=bound, dtype=jnp.float32)
    bias = jax.random.uniform(k_b, (out_features,),
                              minval=-bound, maxval=bound, dtype=jnp.float32)

    out = gcn_conv_layer(x, edge_index, weight, bias)
    out = jax.block_until_ready(out)

    ref = reference(x, edge_index, weight, bias)
    assert out.shape == (num_nodes, out_features)
    assert jnp.allclose(out, ref, atol=1e-5, rtol=1e-5)

    print("KERNEL_OK")
</pallas_src>

<mosaic_0001>
module attributes {stable_mosaic.version = 11 : i64} {
  func.func @gcn_kernel(%arg0: i32, %arg1: i32, %arg2: memref<16x16xf32, #tpu.memory_space<vmem>>, %arg3: memref<16x8xf32, #tpu.memory_space<vmem>>, %arg4: memref<16x1xf32, #tpu.memory_space<vmem>>, %arg5: memref<8x128xf32, #tpu.memory_space<vmem>>, %arg6: memref<1x128xf32, #tpu.memory_space<vmem>>, %arg7: memref<16x128xf32, #tpu.memory_space<vmem>>, %arg8: memref<16x8xf32, #tpu.memory_space<vmem>>) attributes {dimension_semantics = [#tpu.dimension_semantics<parallel>, #tpu.dimension_semantics<arbitrary>], iteration_bounds = array<i64: 1, 1>, scalar_prefetch = 0 : i64, scratch_operands = 1 : i64, tpu.core_type = #tpu.core_type<tc>, window_params = [{transform_indices = @transform_0, window_bounds = array<i64: 16, 16>}, {transform_indices = @transform_1, window_bounds = array<i64: 16, 8>}, {transform_indices = @transform_2, window_bounds = array<i64: 16, 1>}, {pipeline_mode = #tpu.pipeline_mode<synchronous>, transform_indices = @transform_3, window_bounds = array<i64: 8, 128>}, {pipeline_mode = #tpu.pipeline_mode<synchronous>, transform_indices = @transform_4, window_bounds = array<i64: 1, 128>}, {transform_indices = @transform_5, window_bounds = array<i64: 16, 128>}]} {
    %c0_i32 = arith.constant 0 : i32
    %0 = arith.cmpi eq, %arg1, %c0_i32 : i32
    %1 = arith.extui %0 : i1 to i32
    %c0_i32_0 = arith.constant 0 : i32
    %2 = arith.cmpi ne, %1, %c0_i32_0 : i32
    scf.if %2 {
      %cst_10 = arith.constant 0.000000e+00 : f32
      %12 = vector.broadcast %cst_10 : f32 to vector<16x8xf32>
      %c0_11 = arith.constant 0 : index
      %c0_12 = arith.constant 0 : index
      %13 = vector.load %arg8[%c0_11, %c0_12] : memref<16x8xf32, #tpu.memory_space<vmem>>, vector<16x8xf32>
      tpu.vector_store %arg8[%c0_11, %c0_12], %12 {strides = array<i32>} : memref<16x8xf32, #tpu.memory_space<vmem>>, vector<16x8xf32>,
    } else {
    }
    %c0 = arith.constant 0 : index
    %c0_1 = arith.constant 0 : index
    %3 = vector.load %arg8[%c0, %c0_1] : memref<16x8xf32, #tpu.memory_space<vmem>>, vector<16x8xf32>
    %c0_2 = arith.constant 0 : index
    %c0_3 = arith.constant 0 : index
    %4 = vector.load %arg2[%c0_2, %c0_3] : memref<16x16xf32, #tpu.memory_space<vmem>>, vector<16x16xf32>
    %c0_4 = arith.constant 0 : index
    %c0_5 = arith.constant 0 : index
    %5 = vector.load %arg3[%c0_4, %c0_5] : memref<16x8xf32, #tpu.memory_space<vmem>>, vector<16x8xf32>
    %cst = arith.constant dense<0.000000e+00> : vector<16x8xf32>
    %6 = tpu.matmul %4, %5, %cst {dimension_numbers = #tpu.dot_dimension_numbers<[1], [0], [0], [1], [0, 0, 1, 1], [], []>} : vector<16x16xf32>, vector<16x8xf32>, vector<16x8xf32> -> vector<16x8xf32>
    %7 = arith.addf %3, %6 : vector<16x8xf32>
    %c0_6 = arith.constant 0 : index
    %c0_7 = arith.constant 0 : index
    %8 = vector.load %arg8[%c0_6, %c0_7] : memref<16x8xf32, #tpu.memory_space<vmem>>, vector<16x8xf32>
    tpu.vector_store %arg8[%c0_6, %c0_7], %7 {strides = array<i32>} : memref<16x8xf32, #tpu.memory_space<vmem>>, vector<16x8xf32>,
    %c0_i32_8 = arith.constant 0 : i32
    %9 = arith.cmpi eq, %arg1, %c0_i32_8 : i32
    %10 = arith.extui %9 : i1 to i32
    %c0_i32_9 = arith.constant 0 : i32
    %11 = arith.cmpi ne, %10, %c0_i32_9 : i32
    scf.if %11 {
      %c0_10 = arith.constant 0 : index
      %c0_11 = arith.constant 0 : index
      %12 = vector.load %arg8[%c0_10, %c0_11] : memref<16x8xf32, #tpu.memory_space<vmem>>, vector<16x8xf32>
      %c0_12 = arith.constant 0 : index
      %c0_13 = arith.constant 0 : index
      %13 = vector.load %arg4[%c0_12, %c0_13] : memref<16x1xf32, #tpu.memory_space<vmem>>, vector<16x1xf32>
      %14 = vector.broadcast %13 : vector<16x1xf32> to vector<16x8xf32>
      %15 = arith.divf %12, %14 : vector<16x8xf32>
      %c0_14 = arith.constant 0 : index
      %c0_15 = arith.constant 0 : index
      %16 = vector.load %arg5[%c0_14, %c0_15] : memref<8x128xf32, #tpu.memory_space<vmem>>, vector<8x128xf32>
      %cst_16 = arith.constant dense<0.000000e+00> : vector<16x128xf32>
      %17 = tpu.matmul %15, %16, %cst_16 {dimension_numbers = #tpu.dot_dimension_numbers<[1], [0], [0], [1], [0, 0, 1, 1], [], []>} : vector<16x8xf32>, vector<8x128xf32>, vector<16x128xf32> -> vector<16x128xf32>
      %c0_17 = arith.constant 0 : index
      %c0_18 = arith.constant 0 : index
      %18 = vector.load %arg6[%c0_17, %c0_18] : memref<1x128xf32, #tpu.memory_space<vmem>>, vector<1x128xf32>
      %19 = vector.broadcast %18 : vector<1x128xf32> to vector<16x128xf32>
      %20 = arith.addf %17, %19 : vector<16x128xf32>
      %cst_19 = arith.constant 0.000000e+00 : f32
      %21 = vector.broadcast %cst_19 : f32 to vector<16x128xf32>
      %22 = arith.maximumf %20, %21 : vector<16x128xf32>
      %c0_20 = arith.constant 0 : index
      %c0_21 = arith.constant 0 : index
      %23 = vector.load %arg7[%c0_20, %c0_21] : memref<16x128xf32, #tpu.memory_space<vmem>>, vector<16x128xf32>
      tpu.vector_store %arg7[%c0_20, %c0_21], %22 {strides = array<i32>} : memref<16x128xf32, #tpu.memory_space<vmem>>, vector<16x128xf32>,
    } else {
    }
    return
  }
  func.func @transform_0(%arg0: i32, %arg1: i32) -> (i32, i32) {
    %c0_i32 = arith.constant 0 : i32
    return %arg0, %arg1 : i32, i32
  }
  func.func @transform_1(%arg0: i32, %arg1: i32) -> (i32, i32) {
    %c0_i32 = arith.constant 0 : i32
    %c0_i32_0 = arith.constant 0 : i32
    return %arg1, %c0_i32 : i32, i32
  }
  func.func @transform_2(%arg0: i32, %arg1: i32) -> (i32, i32) {
    %c0_i32 = arith.constant 0 : i32
    %c0_i32_0 = arith.constant 0 : i32
    return %arg0, %c0_i32 : i32, i32
  }
  func.func @transform_3(%arg0: i32, %arg1: i32) -> (i32, i32) {
    %c0_i32 = arith.constant 0 : i32
    %c0_i32_0 = arith.constant 0 : i32
    %c0_i32_1 = arith.constant 0 : i32
    return %c0_i32, %c0_i32_0 : i32, i32
  }
  func.func @transform_4(%arg0: i32, %arg1: i32) -> (i32, i32) {
    %c0_i32 = arith.constant 0 : i32
    %c0_i32_0 = arith.constant 0 : i32
    %c0_i32_1 = arith.constant 0 : i32
    return %c0_i32, %c0_i32_0 : i32, i32
  }
  func.func @transform_5(%arg0: i32, %arg1: i32) -> (i32, i32) {
    %c0_i32 = arith.constant 0 : i32
    %c0_i32_0 = arith.constant 0 : i32
    return %arg0, %c0_i32 : i32, i32
  }
}

</mosaic_0001>

<llo_original>
// kernel: tpu_custom_call.1
$region0: #{tpu_custom_call.1}
  #allocation0 [shape = 'u32[]', space=smem, size = 0x4, offset = 0x4, fixed_abs, tag = 'smem constant byte address 0x4 - core index']
  #allocation1 [shape = 'u32[72,128]{1,0:T(1,128)}', space=vmem, size = 0x9000, scoped, tag = 'internal scratch']
  #allocation2 [shape = 'f32[16,8]{1,0:T(8,128)}', space=vmem, size = 0x2000, scoped, tag = 'scratch operand']
  %s0 = inlined_call_operand.vmem [shape: f32[16,16], index: 0, kind: input, shape index: {}]
  %s1 = inlined_call_operand.vmem [shape: f32[16,8], index: 1, kind: input, shape index: {}]
  %s2 = inlined_call_operand.vmem [shape: f32[16,1], index: 2, kind: input, shape index: {}]
  %s3 = inlined_call_operand.vmem [shape: f32[8,128], index: 3, kind: input, shape index: {}]
  %s4 = inlined_call_operand.vmem [shape: f32[1,128], index: 4, kind: input, shape index: {}]
  %s5 = inlined_call_operand.hbm [shape: f32[16,128], index: 5, kind: output, shape index: {}]
  %s6 = sld [smem:[#allocation0]]
  $region38: #{tpu_custom_call.1} parent=0
    _
  %s8 = ssub.s32 1, %s6
  %s9 = scalar_select 0, %s8, %s6
  $region1: #{tpu_custom_call.1} parent=0
    #allocation3 [shape = 'u8[8192]{0}', space=vmem, size = 0x2000, scoped, tag = 'output window, operand 0, single buffered']
    #allocation4 [shape = 's32[1]{0}', space=sflag, size = 0x4, scoped, tag = 'scoped memory for tpu_custom_call.1']
    %10 = vsyncpa [#allocation4], 0
    // Predicated region
    $region2: #{tpu_custom_call.1} parent=1 // pred_check
      _
    $region3: #{tpu_custom_call.1} parent=1 // pred_check_branch
      %12 = sbr.rel (0) target = $region5
    $region4: #{tpu_custom_call.1} parent=1 // pred_region
      _
    $region5: #{tpu_custom_call.1} parent=1 // pred_fallthru
      _
    // Predicated region
    $region6: #{tpu_custom_call.1} parent=1 // pred_check
      _
    $region7: #{tpu_custom_call.1} parent=1 // pred_check_branch
      %14 = sbr.rel (0) target = $region9
    $region8: #{tpu_custom_call.1} parent=1 // pred_region
      _
    $region9: #{tpu_custom_call.1} parent=1 // pred_fallthru
      _
    // Predicated region
    $region10: #{tpu_custom_call.1} parent=1 // pred_check
      _
    $region11: #{tpu_custom_call.1} parent=1 // pred_check_branch
      %16 = sbr.rel (0) target = $region13
    $region12: #{tpu_custom_call.1} parent=1 // pred_region
      _
    $region13: #{tpu_custom_call.1} parent=1 // pred_fallthru
      _
    // Predicated region
    $region14: #{tpu_custom_call.1} parent=1 // pred_check
      _
    $region15: #{tpu_custom_call.1} parent=1 // pred_check_branch
      %18 = sbr.rel (0) target = $region17
    $region16: #{tpu_custom_call.1} parent=1 // pred_region
      _
    $region17: #{tpu_custom_call.1} parent=1 // pred_fallthru
      _
    // Predicated region
    $region18: #{tpu_custom_call.1} parent=1 // pred_check
      _
    $region19: #{tpu_custom_call.1} parent=1 // pred_check_branch
      %20 = sbr.rel (0) target = $region21
    $region20: #{tpu_custom_call.1} parent=1 // pred_region
      _
    $region21: #{tpu_custom_call.1} parent=1 // pred_fallthru
      _
    %p21 = scmp.eq.s32.totalorder 0, 0
    // Predicated region
    $region22: #{tpu_custom_call.1} parent=1 // pred_check
      %p22 = pneg %p21
    $region23: #{tpu_custom_call.1} parent=1 // pred_check_branch
      %24 = sbr.rel (%p22) target = $region25
    $region24: #{tpu_custom_call.1} parent=1 // pred_region
      %vm25 = vcmask 64512
      %26 = vst.msk [vmem:[#allocation2] sm:$0xff] %vm25, 0.0
      %27 = vst.msk [vmem:[#allocation2 + $0x8] sm:$0xff] %vm25, 0.0
    $region25: #{tpu_custom_call.1} parent=1 // pred_fallthru
      _
    %v28 = vld [vmem:[#allocation2] sm:$0xff]
    %v29 = vld [vmem:[#allocation2 + $0x8] sm:$0xff]
    %v30 = vld [vmem:[%s0] sm:$0xff]
    %v31 = vld [vmem:[%s0 + $0x8] sm:$0xff]
    %v32 = vld [vmem:[%s1] sm:$0xff]
    %v33 = vld [vmem:[%s1 + $0x8] sm:$0xff]
    %vm34 = vcmask 130048
    %v36 = vsel %vm34, %v30, 0
    %v39 = vsel %vm34, %v31, 0
    %41 = vmatpush.msra.mxu0 0.0
    %42 = vmatpush.msra.mxu0 0.0
    %43 = vmatpush.msra.mxu0 0.0
    %44 = vmatpush.msra.mxu0 0.0
    %45 = vmatpush.msra.mxu0 0.0
    %46 = vmatpush.msra.mxu0 0.0
    %47 = vmatpush.msra.mxu0 0.0
    %48 = vmatpush.msra.mxu0 0.0
    %49 = vmatpush.msra.mxu0 0.0
    %50 = vmatpush.msra.mxu0 0.0
    %51 = vmatpush.msra.mxu0 0.0
    %52 = vmatpush.msra.mxu0 0.0
    %53 = vmatpush.msra.mxu0 0.0
    %54 = vmatpush.msra.mxu0 0.0
    %55 = vmatpush.msra.mxu0 %v33
    %56 = vmatpush.msra.mxu0 %v32
    %57 = vmatmul.f32.gmra.mxu0 %v36
    %v58 = vpop.f32.mrf.mxu0
    %v59 = vadd.f32 0.0, %v58
    %60 = vmatmul.f32.gmra.mxu0 %v39
    %v61 = vpop.f32.mrf.mxu0
    %v62 = vadd.f32 0.0, %v61
    %63 = vdwg.mxu0
    %v64 = vadd.f32 %v28, %v59
    %v65 = vadd.f32 %v29, %v62
    %vm66 = vcmask 64512
    %67 = vst.msk [vmem:[#allocation2] sm:$0xff] %vm66, %v64
    %68 = vst.msk [vmem:[#allocation2 + $0x8] sm:$0xff] %vm66, %v65
    // Predicated region
    $region26: #{tpu_custom_call.1} parent=1 // pred_check
      %p69 = pneg %p21
    $region27: #{tpu_custom_call.1} parent=1 // pred_check_branch
      %71 = sbr.rel (%p69) target = $region29
    $region28: #{tpu_custom_call.1} parent=1 // pred_region
      %v72 = vld [vmem:[#allocation2] sm:$0xff]
      %v73 = vld [vmem:[#allocation2 + $0x8] sm:$0xff]
      %v74 = vld [vmem:[%s2] sm:$0xff]
      %v75 = vld [vmem:[%s2 + $0x8] sm:$0xff]
      %77 = vset.pattern.permute.xlu0 0
      %78 = vperm.xlu0 %77, %v74
      %v79 = vpop.permute.xlu0 %78
      %82 = vset.pattern.permute.xlu0 0
      %83 = vperm.xlu0 %82, %v75
      %v84 = vpop.permute.xlu0 %83
      %v86 = vrcp.pop %v79
      %v87 = vmul.f32 %v79, %v86
      %v88 = vsub.f32 1.0, %v87
      %v89 = vmul.f32 %v86, %v88
      %v90 = vadd.f32 %v86, %v89
      %vm91 = vweird.f32 %v79
      %vm92 = vweird.f32 %v86
      %vm93 = vmor %vm91, %vm92
      %v94 = vsel %vm93, %v86, %v90
      %v95 = vand.u32 2147483647, %v79
      %vm96 = vcmp.eq.f32.partialorder %v95, 8.507059e+37
      %v97 = vand.u32 %v79, 2147483648
      %v98 = vor.u32 1.1754944e-38, %v97
      %v99 = vsel %vm96, %v98, %v94
      %v100 = vmul.f32 %v72, %v99
      %v101 = vrcp.pop %v84
      %v102 = vmul.f32 %v84, %v101
      %v103 = vsub.f32 1.0, %v102
      %v104 = vmul.f32 %v101, %v103
      %v105 = vadd.f32 %v101, %v104
      %vm106 = vweird.f32 %v84
      %vm107 = vweird.f32 %v101
      %vm108 = vmor %vm106, %vm107
      %v109 = vsel %vm108, %v101, %v105
      %v110 = vand.u32 2147483647, %v84
      %vm111 = vcmp.eq.f32.partialorder %v110, 8.507059e+37
      %v112 = vand.u32 %v84, 2147483648
      %v113 = vor.u32 1.1754944e-38, %v112
      %v114 = vsel %vm111, %v113, %v109
      %v115 = vmul.f32 %v73, %v114
      %v116 = vld [vmem:[%s3] sm:$0xff]
      %v117 = vld [vmem:[%s4] sm:$0x1]
      %v119 = vperm.slane %v117, 0
      %v122 = vsel %vm66, %v100, 0
      %v125 = vsel %vm66, %v115, 0
      %127 = vmatpush.msra.mxu0 0.0
      %128 = vmatpush.msra.mxu0 0.0
      %129 = vmatpush.msra.mxu0 0.0
      %130 = vmatpush.msra.mxu0 0.0
      %131 = vmatpush.msra.mxu0 0.0
      %132 = vmatpush.msra.mxu0 0.0
      %133 = vmatpush.msra.mxu0 0.0
      %134 = vmatpush.msra.mxu0 0.0
      %135 = vmatpush.msra.mxu0 0.0
      %136 = vmatpush.msra.mxu0 0.0
      %137 = vmatpush.msra.mxu0 0.0
      %138 = vmatpush.msra.mxu0 0.0
      %139 = vmatpush.msra.mxu0 0.0
      %140 = vmatpush.msra.mxu0 0.0
      %141 = vmatpush.msra.mxu0 0.0
      %142 = vmatpush.msra.mxu0 %v116
      %143 = vmatmul.f32.gmra.mxu0 %v122
      %v144 = vpop.f32.mrf.mxu0
      %v145 = vadd.f32 %v119, %v144
      %146 = vmatmul.f32.gmra.mxu0 %v125
      %v147 = vpop.f32.mrf.mxu0
      %v148 = vadd.f32 %v119, %v147
      %149 = vdwg.mxu0
      %v150 = vmax.f32 %v145, 0.0
      %v151 = vmax.f32 %v148, 0.0
      %152 = vst [vmem:[#allocation3] sm:$0xff] %v150
      %153 = vst [vmem:[#allocation3 + $0x8] sm:$0xff] %v151
    $region29: #{tpu_custom_call.1} parent=1 // pred_fallthru
      _
    // Predicated region
    $region30: #{tpu_custom_call.1} parent=1 // pred_check
      _
    $region31: #{tpu_custom_call.1} parent=1 // pred_check_branch
      %155 = sbr.rel (0) target = $region33
    $region32: #{tpu_custom_call.1} parent=1 // pred_region
      %157 = vsyncadd [#allocation4], 0
      %s158 = sshll.u32 [#allocation3], 4
      %s159 = int_to_ptr.vmem [resolvable:$true] %s158
      %s160 = sshll.u32 %s5, 4
      %s161 = int_to_ptr.hbm [resolvable:$true] %s160
      %166 = dma.vmem_to_hbm [thread:$0]  %s159, 256, %s161, [#allocation4], 128, 128, 8
    $region33: #{tpu_custom_call.1} parent=1 // pred_fallthru
      _
    // Predicated region
    $region34: #{tpu_custom_call.1} parent=1 // pred_check
      _
    $region35: #{tpu_custom_call.1} parent=1 // pred_check_branch
      %168 = sbr.rel (0) target = $region37
    $region36: #{tpu_custom_call.1} parent=1 // pred_region
      %170 = dma.done [#allocation4], 256
    $region37: #{tpu_custom_call.1} parent=1 // pred_fallthru
      _
    %171 = vsyncpa [#allocation4], 1

</llo_original>
